<compile_context>
chip_gen: v7x
topology: tpu7x:2x2x1
jax: 0.10.0
libtpu: 0.0.40
codegen_flags: <defaults>
</compile_context>

<pallas_src>
import functools

import jax
import jax.numpy as jnp
from jax.experimental import pallas as pl
from jax.experimental.pallas import tpu as pltpu


def _round_up(v, m):
    return (v + m - 1) // m * m


def _softplus(x):
    # Numerically stable softplus (matches torch.nn.Softplus beta=1, incl. large-x regime).
    return jnp.maximum(x, 0.0) + jnp.log1p(jnp.exp(-jnp.abs(x)))


def adapter_kernel(x_ref, w1_ref, b1_ref, w2_ref, b2_ref, o_ref, *, n_chunks):
    # Grid-invariant operands: load once per grid step, reuse across chunks.
    w1 = w1_ref[...]                              # (dim,   dim_p)  bf16
    w2 = w2_ref[...]                              # (dim_p, dim)    bf16
    b1 = b1_ref[...].astype(jnp.float32)          # (1, dim_p)
    b2 = b2_ref[...].astype(jnp.float32)          # (1, dim)

    tm = x_ref.shape[0]
    cm = tm // n_chunks

    # Static chunk loop: lets the scheduler interleave chunk k+1's MXU work with chunk k's
    # bias-add / softplus (VPU + EUP) instead of serializing the whole tile.
    for c in range(n_chunks):
        rows = pl.ds(c * cm, cm)
        xc = x_ref[rows, :].astype(w1.dtype)
        h = jnp.dot(xc, w1, preferred_element_type=jnp.float32)      # (cm, dim_p) f32 acc
        h = _softplus(h + b1)                                         # f32 (v5e-safe)
        y = jnp.dot(h.astype(w2.dtype), w2,
                    preferred_element_type=jnp.float32)               # (cm, dim) f32 acc
        y = _softplus(y + b2)
        o_ref[rows, :] = y.astype(o_ref.dtype)


def prepare_adapter_params(w1, b1, w2, b2, *, weight_dtype=jnp.bfloat16):
    """One-time parameter prep (outside the jitted forward).

    Torch (out, in) weights are transposed to (in, out).  Only W1's output-feature axis and
    W2's input (K) axis are zero-padded to a 128 multiple, so x and the kernel output keep
    their natural feature width (no wrapper-side pad/slice HBM copies).  Zero K-rows in W2
    kill the softplus(0)=log(2) values carried by padded hidden lanes -> exact valid output.
    Weights are stored in bf16 by default (f32 accumulation happens in-kernel); pass
    weight_dtype=jnp.float32 for full precision at ~3x lower MXU throughput.
    """
    dim = w1.shape[0]
    dim_p = _round_up(dim, 128)
    pad = dim_p - dim
    w1_t = jnp.pad(jnp.transpose(w1), ((0, 0), (0, pad))).astype(weight_dtype)  # (dim, dim_p)
    w2_t = jnp.pad(jnp.transpose(w2), ((0, pad), (0, 0))).astype(weight_dtype)  # (dim_p, dim)
    b1_p = jnp.pad(b1, (0, pad)).reshape(1, dim_p).astype(jnp.float32)
    b2_p = b2.reshape(1, dim).astype(jnp.float32)
    return w1_t, b1_p, w2_t, b2_p


@functools.partial(jax.jit, static_argnames=("tile_m",))
def adapter_forward(x, w1_t, b1, w2_t, b2, *, tile_m=256):
    """x: (..., dim).  w1_t: (dim, dim_p), w2_t: (dim_p, dim) pre-transposed (hidden width
    zero-padded to a 128-multiple), b1: (1, dim_p), b2: (1, dim)."""
    orig_shape = x.shape
    dim = orig_shape[-1]
    dim_p = w1_t.shape[1]

    x2d = x.reshape(-1, dim)
    n = x2d.shape[0]

    # dtype-aware sublane alignment for the row tile (f32: 8, bf16: 16, int8/fp8: 32).
    row_align = {4: 8, 2: 16, 1: 32}.get(x2d.dtype.itemsize, 8)

    w_bytes = w1_t.size * w1_t.dtype.itemsize + w2_t.size * w2_t.dtype.itemsize
    b_bytes = b1.size * b1.dtype.itemsize + b2.size * b2.dtype.itemsize

    # Large resident weights (very large dim): shrink the row tile to stay inside v7x VMEM.
    if w_bytes > 24 * 1024 * 1024:
        tile_m = min(tile_m, 128)

    n_aligned = _round_up(n, row_align)
    tm = min(tile_m, n_aligned)
    # v7x megacore: prefer >= 2 grid steps (one per TensorCore) when the row count allows it.
    if pl.cdiv(n, tm) < 2 and n_aligned >= 2 * row_align:
        tm = _round_up(pl.cdiv(n, 2), row_align)
    grid = (pl.cdiv(n, tm),)

    # Split the row tile into static sub-chunks so MXU and VPU/EUP work can overlap.
    n_chunks = 1
    for c in (4, 2):
        if tm % (c * row_align) == 0 and tm // c >= 32:
            n_chunks = c
            break

    itemsize = x2d.dtype.itemsize
    cost = pl.CostEstimate(
        flops=4 * n * dim * dim_p,                 # two (n,dim)x(dim,dim_p)-class matmuls
        transcendentals=2 * n * (dim_p + dim),     # exp + log1p per softplus element
        bytes_accessed=2 * n * dim * itemsize + w_bytes + b_bytes,
    )

    # VMEM: single-buffered weights/biases + double-buffered x/out row tiles + f32/bf16
    # intermediates, plus headroom for compiler scratch.  Capped well below 128 MiB and
    # sized to the real footprint so large dims don't ask for all of v7x's 64 MiB.
    footprint = (w_bytes + b_bytes
                 + 2 * tm * dim * itemsize          # x tile (double-buffered)
                 + 2 * tm * dim * itemsize          # out tile (double-buffered)
                 + 3 * tm * dim_p * 4)              # h / y f32 + bf16 temps
    vmem_limit = int(min(100 * 1024 * 1024,
                         max(32 * 1024 * 1024, footprint + 16 * 1024 * 1024)))

    resident = dict(pipeline_mode=pl.Buffered(buffer_count=1))  # grid-invariant operands

    out = pl.pallas_call(
        functools.partial(adapter_kernel, n_chunks=n_chunks),
        out_shape=jax.ShapeDtypeStruct((n, dim), x.dtype),
        grid_spec=pltpu.PrefetchScalarGridSpec(
            num_scalar_prefetch=0,
            grid=grid,
            in_specs=[
                pl.BlockSpec((tm, dim), lambda i: (i, 0)),                  # x row tile
                pl.BlockSpec((dim, dim_p), lambda i: (0, 0), **resident),   # W1^T (resident)
                pl.BlockSpec((1, dim_p), lambda i: (0, 0), **resident),     # b1
                pl.BlockSpec((dim_p, dim), lambda i: (0, 0), **resident),   # W2^T (resident)
                pl.BlockSpec((1, dim), lambda i: (0, 0), **resident),       # b2
            ],
            out_specs=pl.BlockSpec((tm, dim), lambda i: (i, 0)),
        ),
        compiler_params=pltpu.CompilerParams(
            dimension_semantics=("parallel",),
            vmem_limit_bytes=vmem_limit,
        ),
        cost_estimate=cost,
    )(x2d, w1_t, b1, w2_t, b2)

    return out.reshape(orig_shape)


def init_adapter_params(key, dim, dtype=jnp.float32):
    """Deterministic init mimicking PyTorch nn.Linear default (uniform +/- 1/sqrt(dim))."""
    k1, k2, k3, k4 = jax.random.split(key, 4)
    bound = 1.0 / float(dim) ** 0.5
    w1 = jax.random.uniform(k1, (dim, dim), dtype, -bound, bound)  # torch (out, in) layout
    b1 = jax.random.uniform(k2, (dim,), dtype, -bound, bound)
    w2 = jax.random.uniform(k3, (dim, dim), dtype, -bound, bound)
    b2 = jax.random.uniform(k4, (dim,), dtype, -bound, bound)
    return w1, b1, w2, b2


if __name__ == "__main__":
    key = jax.random.PRNGKey(0)
    dim = 32
    k_x, k_x2, k_p = jax.random.split(key, 3)

    w1, b1, w2, b2 = init_adapter_params(k_p, dim)
    # One-time prep: transpose, pad hidden width to 128, cast weights to bf16.
    w1_t, b1_p, w2_t, b2_p = prepare_adapter_params(w1, b1, w2, b2)

    # Pure-JAX f32 reference (matches torch: Linear -> Softplus -> Linear -> Softplus).
    def ref(xx):
        h = jax.nn.softplus(xx @ w1.T + b1)
        return jax.nn.softplus(h @ w2.T + b2)

    # Case 1: canonical small adapter input (batch=2, seq=8, dim=32).
    x = jax.random.normal(k_x, (2, 8, dim), jnp.float32)
    out = jax.block_until_ready(adapter_forward(x, w1_t, b1_p, w2_t, b2_p))
    assert out.shape == x.shape
    err = float(jnp.max(jnp.abs(out - ref(x))))
    # bf16 weights -> tolerance loosened vs pure-f32 (per review); f32 accumulation keeps it small.
    assert jnp.allclose(out, ref(x), atol=3e-2, rtol=3e-2), f"mismatch: max abs err {err}"

    # Case 2: ragged row count (exercises the masked last grid block and a 2-step grid).
    x2 = jax.random.normal(k_x2, (2, 33, dim), jnp.float32)
    out2 = jax.block_until_ready(adapter_forward(x2, w1_t, b1_p, w2_t, b2_p))
    assert out2.shape == x2.shape
    err2 = float(jnp.max(jnp.abs(out2 - ref(x2))))
    assert jnp.allclose(out2, ref(x2), atol=3e-2, rtol=3e-2), f"mismatch: max abs err {err2}"

    print("KERNEL_OK")
</pallas_src>

<mosaic_0001>
module attributes {stable_mosaic.version = 11 : i64} {
  func.func @adapter_kernel(%arg0: i32, %arg1: memref<8x32xf32, #tpu.memory_space<vmem>>, %arg2: memref<32x128xbf16, #tpu.memory_space<vmem>>, %arg3: memref<1x128xf32, #tpu.memory_space<vmem>>, %arg4: memref<128x32xbf16, #tpu.memory_space<vmem>>, %arg5: memref<1x32xf32, #tpu.memory_space<vmem>>, %arg6: memref<8x32xf32, #tpu.memory_space<vmem>>) attributes {dimension_semantics = [#tpu.dimension_semantics<parallel>], iteration_bounds = array<i64: 2>, scalar_prefetch = 0 : i64, scratch_operands = 0 : i64, tpu.core_type = #tpu.core_type<tc>, window_params = [{transform_indices = @transform_0, window_bounds = array<i64: 8, 32>}, {pipeline_mode = #tpu.pipeline_mode<synchronous>, transform_indices = @transform_1, window_bounds = array<i64: 32, 128>}, {pipeline_mode = #tpu.pipeline_mode<synchronous>, transform_indices = @transform_2, window_bounds = array<i64: 1, 128>}, {pipeline_mode = #tpu.pipeline_mode<synchronous>, transform_indices = @transform_3, window_bounds = array<i64: 128, 32>}, {pipeline_mode = #tpu.pipeline_mode<synchronous>, transform_indices = @transform_4, window_bounds = array<i64: 1, 32>}, {transform_indices = @transform_5, window_bounds = array<i64: 8, 32>}]} {
    %c0 = arith.constant 0 : index
    %c0_0 = arith.constant 0 : index
    %0 = vector.load %arg2[%c0, %c0_0] : memref<32x128xbf16, #tpu.memory_space<vmem>>, vector<32x128xbf16>
    %c0_1 = arith.constant 0 : index
    %c0_2 = arith.constant 0 : index
    %1 = vector.load %arg4[%c0_1, %c0_2] : memref<128x32xbf16, #tpu.memory_space<vmem>>, vector<128x32xbf16>
    %c0_3 = arith.constant 0 : index
    %c0_4 = arith.constant 0 : index
    %2 = vector.load %arg3[%c0_3, %c0_4] : memref<1x128xf32, #tpu.memory_space<vmem>>, vector<1x128xf32>
    %c0_5 = arith.constant 0 : index
    %c0_6 = arith.constant 0 : index
    %3 = vector.load %arg5[%c0_5, %c0_6] : memref<1x32xf32, #tpu.memory_space<vmem>>, vector<1x32xf32>
    %c0_7 = arith.constant 0 : index
    %c0_8 = arith.constant 0 : index
    %4 = vector.load %arg1[%c0_7, %c0_8] : memref<8x32xf32, #tpu.memory_space<vmem>>, vector<8x32xf32>
    %5 = arith.truncf %4 : vector<8x32xf32> to vector<8x32xbf16>
    %cst = arith.constant dense<0.000000e+00> : vector<8x128xf32>
    %6 = tpu.matmul %5, %0, %cst {dimension_numbers = #tpu.dot_dimension_numbers<[1], [0], [0], [1], [0, 0, 1, 1], [], []>} : vector<8x32xbf16>, vector<32x128xbf16>, vector<8x128xf32> -> vector<8x128xf32>
    %7 = vector.broadcast %2 : vector<1x128xf32> to vector<8x128xf32>
    %8 = arith.addf %6, %7 : vector<8x128xf32>
    %cst_9 = arith.constant 0.000000e+00 : f32
    %9 = vector.broadcast %cst_9 : f32 to vector<8x128xf32>
    %10 = arith.maximumf %8, %9 : vector<8x128xf32>
    %11 = math.absf %8 : vector<8x128xf32>
    %cst_10 = arith.constant 0.000000e+00 : f32
    %12 = vector.broadcast %cst_10 : f32 to vector<8x128xf32>
    %13 = arith.subf %12, %11 : vector<8x128xf32>
    %14 = math.exp %13 : vector<8x128xf32>
    %15 = math.log1p %14 : vector<8x128xf32>
    %16 = arith.addf %10, %15 : vector<8x128xf32>
    %17 = arith.truncf %16 : vector<8x128xf32> to vector<8x128xbf16>
    %cst_11 = arith.constant dense<0.000000e+00> : vector<8x32xf32>
    %18 = tpu.matmul %17, %1, %cst_11 {dimension_numbers = #tpu.dot_dimension_numbers<[1], [0], [0], [1], [0, 0, 1, 1], [], []>} : vector<8x128xbf16>, vector<128x32xbf16>, vector<8x32xf32> -> vector<8x32xf32>
    %19 = vector.broadcast %3 : vector<1x32xf32> to vector<8x32xf32>
    %20 = arith.addf %18, %19 : vector<8x32xf32>
    %cst_12 = arith.constant 0.000000e+00 : f32
    %21 = vector.broadcast %cst_12 : f32 to vector<8x32xf32>
    %22 = arith.maximumf %20, %21 : vector<8x32xf32>
    %23 = math.absf %20 : vector<8x32xf32>
    %cst_13 = arith.constant 0.000000e+00 : f32
    %24 = vector.broadcast %cst_13 : f32 to vector<8x32xf32>
    %25 = arith.subf %24, %23 : vector<8x32xf32>
    %26 = math.exp %25 : vector<8x32xf32>
    %27 = math.log1p %26 : vector<8x32xf32>
    %28 = arith.addf %22, %27 : vector<8x32xf32>
    %c0_14 = arith.constant 0 : index
    %c0_15 = arith.constant 0 : index
    %29 = vector.load %arg6[%c0_14, %c0_15] : memref<8x32xf32, #tpu.memory_space<vmem>>, vector<8x32xf32>
    tpu.vector_store %arg6[%c0_14, %c0_15], %28 {strides = array<i32>} : memref<8x32xf32, #tpu.memory_space<vmem>>, vector<8x32xf32>,
    return
  }
  func.func @transform_0(%arg0: i32) -> (i32, i32) {
    %c0_i32 = arith.constant 0 : i32
    %c0_i32_0 = arith.constant 0 : i32
    return %arg0, %c0_i32 : i32, i32
  }
  func.func @transform_1(%arg0: i32) -> (i32, i32) {
    %c0_i32 = arith.constant 0 : i32
    %c0_i32_0 = arith.constant 0 : i32
    %c0_i32_1 = arith.constant 0 : i32
    return %c0_i32, %c0_i32_0 : i32, i32
  }
  func.func @transform_2(%arg0: i32) -> (i32, i32) {
    %c0_i32 = arith.constant 0 : i32
    %c0_i32_0 = arith.constant 0 : i32
    %c0_i32_1 = arith.constant 0 : i32
    return %c0_i32, %c0_i32_0 : i32, i32
  }
  func.func @transform_3(%arg0: i32) -> (i32, i32) {
    %c0_i32 = arith.constant 0 : i32
    %c0_i32_0 = arith.constant 0 : i32
    %c0_i32_1 = arith.constant 0 : i32
    return %c0_i32, %c0_i32_0 : i32, i32
  }
  func.func @transform_4(%arg0: i32) -> (i32, i32) {
    %c0_i32 = arith.constant 0 : i32
    %c0_i32_0 = arith.constant 0 : i32
    %c0_i32_1 = arith.constant 0 : i32
    return %c0_i32, %c0_i32_0 : i32, i32
  }
  func.func @transform_5(%arg0: i32) -> (i32, i32) {
    %c0_i32 = arith.constant 0 : i32
    %c0_i32_0 = arith.constant 0 : i32
    return %arg0, %c0_i32 : i32, i32
  }
}

</mosaic_0001>

<llo_original>
// kernel: adapter_forward.1
$region0: #{adapter_forward.1}
  #allocation0 [shape = 'u32[]', space=smem, size = 0x4, offset = 0x4, fixed_abs, tag = 'smem constant byte address 0x4 - core index']
  #allocation1 [shape = 'u32[144,128]{1,0:T(1,128)}', space=vmem, size = 0x12000, scoped, tag = 'internal scratch']
  %s0 = inlined_call_operand.vmem [shape: f32[16,32], index: 0, kind: input, shape index: {}]
  %s1 = inlined_call_operand.vmem [shape: bf16[32,128], index: 1, kind: input, shape index: {}]
  %s2 = inlined_call_operand.vmem [shape: f32[1,128], index: 2, kind: input, shape index: {}]
  %s3 = inlined_call_operand.vmem [shape: bf16[128,32], index: 3, kind: input, shape index: {}]
  %s4 = inlined_call_operand.vmem [shape: f32[1,32], index: 4, kind: input, shape index: {}]
  %s5 = inlined_call_operand.hbm [shape: f32[16,32], index: 5, kind: output, shape index: {}]
  %s6 = sld [smem:[#allocation0]]
  $region53: #{adapter_forward.1} parent=0
    _
  %s8 = ssub.s32 1, %s6
  %s9 = scalar_select 0, %s8, %s6
  $region1: #{adapter_forward.1} parent=0
    #allocation2 [shape = 'u8[8192]{0}', space=vmem, size = 0x2000, scoped, tag = 'output window, operand 0']
    #allocation3 [shape = 's32[2]{0}', space=sflag, size = 0x8, scoped, tag = 'scoped memory for adapter_forward.1']
    %10 = vsyncpa [#allocation3], 0
    %s11 = scalar_lea.sflag [#allocation3], 1
    %12 = vsyncpa %s11, 0
    loop: start=0, step=1, limit=4
    $region2: #{adapter_forward.1} parent=1 // loop_pre_header
      _
    $region3: #{adapter_forward.1} parent=1 // loop_header
      %s14 = sphi 0, %s18
      %p15 = scmp.ge.s32.totalorder %s14, 4
      %s24 = sphi 0, %s26
      %s27 = sphi 0, %s24
      %s28 = sphi 0, %s27
      %s44 = sphi 0, %s28
      %s48 = sphi 0, %s48
      %s50 = sphi 0, %s48
      %s51 = sphi 0, %s50
      %s65 = sphi 0, %s51
      %s69 = sphi 0, %s69
      %s71 = sphi 0, %s69
      %s72 = sphi 0, %s71
      %s86 = sphi 0, %s72
      %s90 = sphi 0, %s90
      %s92 = sphi 0, %s90
      %s93 = sphi 0, %s92
      %s107 = sphi 0, %s93
      %s111 = sphi 0, %s111
      %s113 = sphi 0, %s111
      %s114 = sphi 0, %s113
      %s128 = sphi 0, %s114
      %s134 = sphi 0, %s136
      %s137 = sphi 0, %s134
      %s138 = sphi 0, %s137
      %s154 = sphi 0, %s138
    $region4: #{adapter_forward.1} parent=1 // loop_header_branch
      %17 = sbr.rel (%p15) target = $region8
    $region5: #{adapter_forward.1} parent=1 // loop_body
      %s19 = ssub.s32 %s14, 1
      %s20 = ssub.s32 %s14, 2
      %s21 = sadd.s32 %s14, 1
      %s22 = ssub.s32 %s14, %s21
      %p23 = scmp.eq.s32.totalorder %s22, 0
      %s25 = sadd.s32 %s24, 1
      %s26 = scalar_select %p23, %s24, %s25
      %p29 = pneg %p23
      %p30 = scmp.eq.s32.totalorder %s14, 1
      %p31 = por %p29, %p30
      %p32 = scmp.ne.s32.totalorder %s24, %s27
      %p33 = scmp.eq.s32.totalorder %s14, 0
      %p34 = por %p32, %p33
      %p35 = scmp.ne.s32.totalorder %s24, %s27
      %p36 = scmp.eq.s32.totalorder %s19, 1
      %p37 = por %p35, %p36
      %p38 = scmp.ne.s32.totalorder %s27, %s28
      %p39 = scmp.eq.s32.totalorder %s19, 0
      %p40 = por %p38, %p39
      %p41 = scmp.ne.s32.totalorder %s27, %s28
      %p42 = scmp.eq.s32.totalorder %s20, 1
      %p43 = por %p41, %p42
      %p45 = scmp.ne.s32.totalorder %s28, %s44
      %p46 = scmp.eq.s32.totalorder %s20, 0
      %p47 = por %p45, %p46
      %s49 = sadd.s32 %s48, 1
      %p52 = scmp.eq.s32.totalorder %s14, 1
      %p53 = scmp.ne.s32.totalorder %s48, %s50
      %p54 = scmp.eq.s32.totalorder %s14, 0
      %p55 = por %p53, %p54
      %p56 = scmp.ne.s32.totalorder %s48, %s50
      %p57 = scmp.eq.s32.totalorder %s19, 1
      %p58 = por %p56, %p57
      %p59 = scmp.ne.s32.totalorder %s50, %s51
      %p60 = scmp.eq.s32.totalorder %s19, 0
      %p61 = por %p59, %p60
      %p62 = scmp.ne.s32.totalorder %s50, %s51
      %p63 = scmp.eq.s32.totalorder %s20, 1
      %p64 = por %p62, %p63
      %p66 = scmp.ne.s32.totalorder %s51, %s65
      %p67 = scmp.eq.s32.totalorder %s20, 0
      %p68 = por %p66, %p67
      %s70 = sadd.s32 %s69, 1
      %p73 = scmp.eq.s32.totalorder %s14, 1
      %p74 = scmp.ne.s32.totalorder %s69, %s71
      %p75 = scmp.eq.s32.totalorder %s14, 0
      %p76 = por %p74, %p75
      %p77 = scmp.ne.s32.totalorder %s69, %s71
      %p78 = scmp.eq.s32.totalorder %s19, 1
      %p79 = por %p77, %p78
      %p80 = scmp.ne.s32.totalorder %s71, %s72
      %p81 = scmp.eq.s32.totalorder %s19, 0
      %p82 = por %p80, %p81
      %p83 = scmp.ne.s32.totalorder %s71, %s72
      %p84 = scmp.eq.s32.totalorder %s20, 1
      %p85 = por %p83, %p84
      %p87 = scmp.ne.s32.totalorder %s72, %s86
      %p88 = scmp.eq.s32.totalorder %s20, 0
      %p89 = por %p87, %p88
      %s91 = sadd.s32 %s90, 1
      %p94 = scmp.eq.s32.totalorder %s14, 1
      %p95 = scmp.ne.s32.totalorder %s90, %s92
      %p96 = scmp.eq.s32.totalorder %s14, 0
      %p97 = por %p95, %p96
      %p98 = scmp.ne.s32.totalorder %s90, %s92
      %p99 = scmp.eq.s32.totalorder %s19, 1
      %p100 = por %p98, %p99
      %p101 = scmp.ne.s32.totalorder %s92, %s93
      %p102 = scmp.eq.s32.totalorder %s19, 0
      %p103 = por %p101, %p102
      %p104 = scmp.ne.s32.totalorder %s92, %s93
      %p105 = scmp.eq.s32.totalorder %s20, 1
      %p106 = por %p104, %p105
      %p108 = scmp.ne.s32.totalorder %s93, %s107
      %p109 = scmp.eq.s32.totalorder %s20, 0
      %p110 = por %p108, %p109
      %s112 = sadd.s32 %s111, 1
      %p115 = scmp.eq.s32.totalorder %s14, 1
      %p116 = scmp.ne.s32.totalorder %s111, %s113
      %p117 = scmp.eq.s32.totalorder %s14, 0
      %p118 = por %p116, %p117
      %p119 = scmp.ne.s32.totalorder %s111, %s113
      %p120 = scmp.eq.s32.totalorder %s19, 1
      %p121 = por %p119, %p120
      %p122 = scmp.ne.s32.totalorder %s113, %s114
      %p123 = scmp.eq.s32.totalorder %s19, 0
      %p124 = por %p122, %p123
      %p125 = scmp.ne.s32.totalorder %s113, %s114
      %p126 = scmp.eq.s32.totalorder %s20, 1
      %p127 = por %p125, %p126
      %p129 = scmp.ne.s32.totalorder %s114, %s128
      %p130 = scmp.eq.s32.totalorder %s20, 0
      %p131 = por %p129, %p130
      %s132 = ssub.s32 %s14, %s21
      %p133 = scmp.eq.s32.totalorder %s132, 0
      %s135 = sadd.s32 %s134, 1
      %s136 = scalar_select %p133, %s134, %s135
      %p139 = pneg %p133
      %p140 = scmp.eq.s32.totalorder %s14, 1
      %p141 = por %p139, %p140
      %p142 = scmp.ne.s32.totalorder %s134, %s137
      %p143 = scmp.eq.s32.totalorder %s14, 0
      %p144 = por %p142, %p143
      %p145 = scmp.ne.s32.totalorder %s134, %s137
      %p146 = scmp.eq.s32.totalorder %s19, 1
      %p147 = por %p145, %p146
      %p148 = scmp.ne.s32.totalorder %s137, %s138
      %p149 = scmp.eq.s32.totalorder %s19, 0
      %p150 = por %p148, %p149
      %p151 = scmp.ne.s32.totalorder %s137, %s138
      %p152 = scmp.eq.s32.totalorder %s20, 1
      %p153 = por %p151, %p152
      %p155 = scmp.ne.s32.totalorder %s138, %s154
      %p156 = scmp.eq.s32.totalorder %s20, 0
      %p157 = por %p155, %p156
      %p158 = scmp.le.s32.totalorder 1, %s14
      %p159 = scmp.lt.s32.totalorder %s14, 3
      %p160 = pnand %p158, %p159
      %p161 = pneg %p160
      // Predicated region
      $region9: #{adapter_forward.1} parent=5 // pred_check
        _
      $region10: #{adapter_forward.1} parent=5 // pred_check_branch
        %163 = sbr.rel (%p160) target = $region12
      $region11: #{adapter_forward.1} parent=5 // pred_region
        %s164 = ssub.s32 %s14, 1
        // Predicated region
        $region13: #{adapter_forward.1} parent=11 // pred_check
          %p165 = pneg %p61
        $region14: #{adapter_forward.1} parent=11 // pred_check_branch
          %167 = sbr.rel (%p165) target = $region16
        $region15: #{adapter_forward.1} parent=11 // pred_region
          _
        $region16: #{adapter_forward.1} parent=11 // pred_fallthru
          _
        // Predicated region
        $region17: #{adapter_forward.1} parent=11 // pred_check
          %p168 = pneg %p82
        $region18: #{adapter_forward.1} parent=11 // pred_check_branch
          %170 = sbr.rel (%p168) target = $region20
        $region19: #{adapter_forward.1} parent=11 // pred_region
          _
        $region20: #{adapter_forward.1} parent=11 // pred_fallthru
          _
        // Predicated region
        $region21: #{adapter_forward.1} parent=11 // pred_check
          %p171 = pneg %p103
        $region22: #{adapter_forward.1} parent=11 // pred_check_branch
          %173 = sbr.rel (%p171) target = $region24
        $region23: #{adapter_forward.1} parent=11 // pred_region
          _
        $region24: #{adapter_forward.1} parent=11 // pred_fallthru
          _
        // Predicated region
        $region25: #{adapter_forward.1} parent=11 // pred_check
          %p174 = pneg %p124
        $region26: #{adapter_forward.1} parent=11 // pred_check_branch
          %176 = sbr.rel (%p174) target = $region28
        $region27: #{adapter_forward.1} parent=11 // pred_region
          _
        $region28: #{adapter_forward.1} parent=11 // pred_fallthru
          _
      $region12: #{adapter_forward.1} parent=5 // pred_fallthru
        _
      %p177 = scmp.lt.s32.totalorder %s14, 2
      // Predicated region
      $region29: #{adapter_forward.1} parent=5 // pred_check
        %p178 = pneg %p177
      $region30: #{adapter_forward.1} parent=5 // pred_check_branch
        %180 = sbr.rel (%p178) target = $region32
      $region31: #{adapter_forward.1} parent=5 // pred_region
        // Predicated region
        $region33: #{adapter_forward.1} parent=31 // pred_check
          %p181 = pneg %p34
        $region34: #{adapter_forward.1} parent=31 // pred_check_branch
          %183 = sbr.rel (%p181) target = $region36
        $region35: #{adapter_forward.1} parent=31 // pred_region
          %p184 = scmp.lt.s32.totalorder %s14, 1
          %s185 = scalar_select %p184, %s14, 1
          %s186 = smul.addr %s185, 8
          %s187 = scalar_lea.vmem %s0, %s186
        $region36: #{adapter_forward.1} parent=31 // pred_fallthru
          _
      $region32: #{adapter_forward.1} parent=5 // pred_fallthru
        _
      %p188 = scmp.le.s32.totalorder 1, %s14
      %p189 = scmp.lt.s32.totalorder %s14, 3
      %p190 = pnand %p188, %p189
      %p191 = pneg %p190
      // Predicated region
      $region37: #{adapter_forward.1} parent=5 // pred_check
        _
      $region38: #{adapter_forward.1} parent=5 // pred_check_branch
        %193 = sbr.rel (%p190) target = $region40
      $region39: #{adapter_forward.1} parent=5 // pred_region
        %s194 = ssub.s32 %s14, 1
        %p195 = scmp.lt.s32.totalorder %s19, 1
        %s196 = scalar_select %p195, %s19, 1
        %s197 = smul.addr %s196, 8
        %s198 = scalar_lea.vmem %s0, %s197
        %p199 = pneg %p40
        %p200 = pneg %p37
        %p201 = pneg %p61
        %p202 = pneg %p58
        %p203 = pneg %p82
        %p204 = pneg %p79
        %p205 = pneg %p103
        %p206 = pneg %p100
        %p207 = pneg %p124
        %p208 = pneg %p121
        %p209 = pneg %p150
        %p210 = pneg %p147
        %s211 = sand.u32 %s137, 1
        %s212 = scalar_lea.sflag [#allocation3], %s211
        %s213 = sand.u32 %s137, 1
        %s214 = smul.addr %s213, 8
        %s215 = scalar_lea.vmem [#allocation2], %s214
        %p216 = scmp.lt.s32.totalorder %s19, 1
        %s217 = scalar_select %p216, %s19, 1
        %s218 = smul.addr %s217, 8
        %s219 = scalar_lea.vmem %s0, %s218
        %v221 = vld [vmem:[%s1] sm:$0xf]
        %v222 = vld [vmem:[%s1 + $0x4] sm:$0xf]
        %v223 = vld [vmem:[%s1 + $0x8] sm:$0xf]
        %v224 = vld [vmem:[%s1 + $0xc] sm:$0xf]
        %v225 = vld [vmem:[%s3] sm:$0xf]
        %v226 = vld [vmem:[%s3 + $0x4] sm:$0xf]
        %v227 = vld [vmem:[%s3 + $0x8] sm:$0xf]
        %v228 = vld [vmem:[%s3 + $0xc] sm:$0xf]
        %v229 = vld [vmem:[%s3 + $0x10] sm:$0xf]
        %v230 = vld [vmem:[%s3 + $0x14] sm:$0xf]
        %v231 = vld [vmem:[%s3 + $0x18] sm:$0xf]
        %v232 = vld [vmem:[%s3 + $0x1c] sm:$0xf]
        %v233 = vld [vmem:[%s3 + $0x20] sm:$0xf]
        %v234 = vld [vmem:[%s3 + $0x24] sm:$0xf]
        %v235 = vld [vmem:[%s3 + $0x28] sm:$0xf]
        %v236 = vld [vmem:[%s3 + $0x2c] sm:$0xf]
        %v237 = vld [vmem:[%s3 + $0x30] sm:$0xf]
        %v238 = vld [vmem:[%s3 + $0x34] sm:$0xf]
        %v239 = vld [vmem:[%s3 + $0x38] sm:$0xf]
        %v240 = vld [vmem:[%s3 + $0x3c] sm:$0xf]
        %v241 = vld [vmem:[%s2] sm:$0x1]
        %v242 = vld [vmem:[%s4] sm:$0x1]
        %v243 = vld [vmem:[%s219] sm:$0xff]
        %v244 = vpack.c.bf16 %v243, %v243
        %v246 = vlaneseq
        %v247 = vshrl.u32 %v246, 7
        %v248 = vsub.s32 0, %v247
        %v249 = vrot.slane %v241, %v248
        %v255 = vunpack.c.l.b16 %v221
        %v256 = vunpack.c.l.b16 %v222
        %v257 = vunpack.c.l.b16 %v223
        %v258 = vunpack.c.l.b16 %v224
        %v259 = vpack.c.b16 %v256, %v255
        %v260 = vpack.c.b16 %v258, %v257
        %vm263 = vcmask 261120
        %v265 = vsel %vm263, %v244, 0
        %267 = vmatprep.subr.bf16.mxu0 0
        %268 = vmatpush1.bf16.msra.mxu0 %v259
        %269 = vmatprep.subr.bf16.mxu0 0
        %270 = vmatpush1.bf16.msra.mxu0 %v260
        %271 = vmatprep.subr.bf16.mxu0 0
        %272 = vmatpush1.bf16.msra.mxu0 0
        %273 = vmatprep.subr.bf16.mxu0 0
        %274 = vmatpush1.bf16.msra.mxu0 0
        %275 = vmatprep.subr.bf16.mxu0 0
        %276 = vmatpush1.bf16.msra.mxu0 0
        %277 = vmatprep.subr.bf16.mxu0 0
        %278 = vmatpush1.bf16.msra.mxu0 0
        %279 = vmatprep.subr.bf16.mxu0 0
        %280 = vmatpush1.bf16.msra.mxu0 0
        %281 = vmatprep.subr.bf16.mxu0 0
        %282 = vmatpush1.bf16.msra.mxu0 0
        %283 = vmatprep.subr.bf16.mxu0 0
        %284 = vmatpush1.bf16.msra.mxu0 0
        %285 = vmatprep.subr.bf16.mxu0 0
        %286 = vmatpush1.bf16.msra.mxu0 0
        %287 = vmatprep.subr.bf16.mxu0 0
        %288 = vmatpush1.bf16.msra.mxu0 0
        %289 = vmatprep.subr.bf16.mxu0 0
        %290 = vmatpush1.bf16.msra.mxu0 0
        %291 = vmatprep.subr.bf16.mxu0 0
        %292 = vmatpush1.bf16.msra.mxu0 0
        %293 = vmatprep.subr.bf16.mxu0 0
        %294 = vmatpush1.bf16.msra.mxu0 0
        %295 = vmatprep.subr.bf16.mxu0 0
        %296 = vmatpush1.bf16.msra.mxu0 0
        %297 = vmatprep.subr.bf16.mxu0 0
        %298 = vmatpush1.bf16.msra.mxu0 0
        %299 = vmatprep.mubr.bf16.mxu0 0
        %300 = vmatmul.mubr.bf16.gmra.mrb[0].mxu0 %v265
        %v301 = vpop.f32.mrb[0].mxu0
        %v302 = vadd.f32 %v249, %v301
        %v303 = vpop.f32.mrb[0].mxu0
        %v304 = vpop.f32.mrb[0].mxu0
        %v305 = vpop.f32.mrb[0].mxu0
        %306 = vdwg.mxu0
        %v307 = vmax.f32 %v302, 0.0
        %v308 = vand.u32 2147483647, %v302
        %v309 = vsub.f32 0.0, %v308
        %v310 = vmul.f32 %v309, 1.442695
        %v311 = vpow.pop %v310
        %v312 = vadd.f32 %v311, 1.0
        %v313 = vlog2.pop %v312
        %v314 = vmul.f32 %v313, 0.6931472
        %v315 = vmul.f32 -0.5, %v311
        %v316 = vadd.f32 %v315, 1.0
        %v317 = vmul.f32 %v316, %v311
        %v318 = vand.u32 2147483647, %v311
        %vm319 = vcmp.lt.f32.partialorder %v318, 0.0004427343
        %v320 = vsel %vm319, %v317, %v314
        %v321 = vadd.f32 %v307, %v320
        %v322 = vpack.c.bf16 %v321, %v321
        %v324 = vlaneseq
        %v325 = vshrl.u32 %v324, 7
        %v326 = vsub.s32 0, %v325
        %v327 = vrot.slane %v242, %v326
        %v345 = vunpack.c.l.b16 %v225
        %v346 = vunpack.c.l.b16 %v226
        %v347 = vunpack.c.l.b16 %v227
        %v348 = vunpack.c.l.b16 %v228
        %v349 = vunpack.c.l.b16 %v229
        %v350 = vunpack.c.l.b16 %v230
        %v351 = vunpack.c.l.b16 %v231
        %v352 = vunpack.c.l.b16 %v232
        %v353 = vunpack.c.l.b16 %v233
        %v354 = vunpack.c.l.b16 %v234
        %v355 = vunpack.c.l.b16 %v235
        %v356 = vunpack.c.l.b16 %v236
        %v357 = vunpack.c.l.b16 %v237
        %v358 = vunpack.c.l.b16 %v238
        %v359 = vunpack.c.l.b16 %v239
        %v360 = vunpack.c.l.b16 %v240
        %v361 = vpack.c.b16 %v346, %v345
        %v362 = vpack.c.b16 %v348, %v347
        %v363 = vpack.c.b16 %v350, %v349
        %v364 = vpack.c.b16 %v352, %v351
        %v365 = vpack.c.b16 %v354, %v353
        %v366 = vpack.c.b16 %v356, %v355
        %v367 = vpack.c.b16 %v358, %v357
        %v368 = vpack.c.b16 %v360, %v359
        %377 = vmatprep.subr.bf16.mxu0 0
        %378 = vmatpush1.bf16.msra.mxu0 %v361
        %379 = vmatprep.subr.bf16.mxu0 0
        %380 = vmatpush1.bf16.msra.mxu0 %v362
        %381 = vmatprep.subr.bf16.mxu0 0
        %382 = vmatpush1.bf16.msra.mxu0 %v363
        %383 = vmatprep.subr.bf16.mxu0 0
        %384 = vmatpush1.bf16.msra.mxu0 %v364
        %385 = vmatprep.subr.bf16.mxu0 0
        %386 = vmatpush1.bf16.msra.mxu0 %v365
        %387 = vmatprep.subr.bf16.mxu0 0
        %388 = vmatpush1.bf16.msra.mxu0 %v366
        %389 = vmatprep.subr.bf16.mxu0 0
        %390 = vmatpush1.bf16.msra.mxu0 %v367
        %391 = vmatprep.subr.bf16.mxu0 0
        %392 = vmatpush1.bf16.msra.mxu0 %v368
        %393 = vmatprep.subr.bf16.mxu0 0
        %394 = vmatpush1.bf16.msra.mxu0 0
        %395 = vmatprep.subr.bf16.mxu0 0
        %396 = vmatpush1.bf16.msra.mxu0 0
        %397 = vmatprep.subr.bf16.mxu0 0
        %398 = vmatpush1.bf16.msra.mxu0 0
        %399 = vmatprep.subr.bf16.mxu0 0
        %400 = vmatpush1.bf16.msra.mxu0 0
        %401 = vmatprep.subr.bf16.mxu0 0
        %402 = vmatpush1.bf16.msra.mxu0 0
        %403 = vmatprep.subr.bf16.mxu0 0
        %404 = vmatpush1.bf16.msra.mxu0 0
        %405 = vmatprep.subr.bf16.mxu0 0
        %406 = vmatpush1.bf16.msra.mxu0 0
        %407 = vmatprep.subr.bf16.mxu0 0
        %408 = vmatpush1.bf16.msra.mxu0 0
        %409 = vmatprep.mubr.bf16.mxu0 0
        %410 = vmatmul.mubr.bf16.gmra.mrb[0].mxu0 %v322
        %v411 = vpop.f32.mrb[0].mxu0
        %v412 = vadd.f32 %v327, %v411
        %v413 = vpop.f32.mrb[0].mxu0
        %v414 = vpop.f32.mrb[0].mxu0
        %v415 = vpop.f32.mrb[0].mxu0
        %416 = vdwg.mxu0
        %v417 = vmax.f32 %v412, 0.0
        %v418 = vand.u32 2147483647, %v412
        %v419 = vsub.f32 0.0, %v418
        %v420 = vmul.f32 %v419, 1.442695
        %v421 = vpow.pop %v420
        %v422 = vadd.f32 %v421, 1.0
        %v423 = vlog2.pop %v422
        %v424 = vmul.f32 %v423, 0.6931472
        %v425 = vmul.f32 -0.5, %v421
        %v426 = vadd.f32 %v425, 1.0
        %v427 = vmul.f32 %v426, %v421
        %v428 = vand.u32 2147483647, %v421
        %vm429 = vcmp.lt.f32.partialorder %v428, 0.0004427343
        %v430 = vsel %vm429, %v427, %v424
        %v431 = vadd.f32 %v417, %v430
        %432 = vst.msk [vmem:[%s215] sm:$0xff] %vm263, %v431
        %s433 = sand.u32 %s137, 1
        %s434 = scalar_lea.sflag [#allocation3], %s433
        %s435 = sand.u32 %s137, 1
        %s436 = smul.addr %s435, 8
        %s437 = scalar_lea.vmem [#allocation2], %s436
        // Predicated region
        $region41: #{adapter_forward.1} parent=39 // pred_check
          %p438 = pneg %p147
        $region42: #{adapter_forward.1} parent=39 // pred_check_branch
          %440 = sbr.rel (%p438) target = $region44
        $region43: #{adapter_forward.1} parent=39 // pred_region
          %s442 = ssub.s32 128, 128
          %443 = vsyncadd %s434, %s442
          %s444 = smul.addr %s19, 128
          %s445 = scalar_lea.hbm %s5, %s444
          %s447 = sshll.u32 %s437, 4
          %s448 = int_to_ptr.vmem [resolvable:$true] %s447
          %450 = dma.vmem_to_hbm [thread:$0]  %s448, 128, %s445, %s434
        $region44: #{adapter_forward.1} parent=39 // pred_fallthru
          _
      $region40: #{adapter_forward.1} parent=5 // pred_fallthru
        _
      %p451 = scmp.le.s32.totalorder 2, %s14
      // Predicated region
      $region45: #{adapter_forward.1} parent=5 // pred_check
        %p452 = pneg %p451
      $region46: #{adapter_forward.1} parent=5 // pred_check_branch
        %454 = sbr.rel (%p452) target = $region48
      $region47: #{adapter_forward.1} parent=5 // pred_region
        %s455 = ssub.s32 %s14, 2
        // Predicated region
        $region49: #{adapter_forward.1} parent=47 // pred_check
          %p456 = pneg %p153
        $region50: #{adapter_forward.1} parent=47 // pred_check_branch
          %458 = sbr.rel (%p456) target = $region52
        $region51: #{adapter_forward.1} parent=47 // pred_region
          %s459 = sand.u32 %s138, 1
          %s460 = scalar_lea.sflag [#allocation3], %s459
          %s461 = sand.u32 %s138, 1
          %s462 = smul.addr %s461, 8
          %s463 = scalar_lea.vmem [#allocation2], %s462
          %464 = dma.done %s460, 128
        $region52: #{adapter_forward.1} parent=47 // pred_fallthru
          _
      $region48: #{adapter_forward.1} parent=5 // pred_fallthru
        _
    $region6: #{adapter_forward.1} parent=1 // loop_footer
      %s18 = sadd.s32 1, %s14
    $region7: #{adapter_forward.1} parent=1 // loop_footer_branch
      %13 = sbr.rel target = $region3
    $region8: #{adapter_forward.1} parent=1 // loop_exit
      _
    %465 = vsyncpa [#allocation3], 1
    %s466 = scalar_lea.sflag [#allocation3], 1
    %467 = vsyncpa %s466, 1

</llo_original>
